<compile_context>
chip_gen: v5e
topology: v5e:2x2
jax: 0.10.0
libtpu: 0.0.40
codegen_flags: <defaults>
</compile_context>

<pallas_src>
import functools

import jax
import jax.numpy as jnp
from jax.experimental import pallas as pl
from jax.experimental.pallas import tpu as pltpu

# ---------------- problem sizes (small, consistent with the forward) ---------
C, H_IMG, W_IMG = 4, 4, 4
D_IN = C * H_IMG * W_IMG          # 64 flattened image features
HIDDEN = 32                       # representation output width
N_ACTIONS = 4                     # policy logits width
HEADS_W = 1 + N_ACTIONS           # fused head output width: [value | policy]

# ---------------- packed parameter slab layout --------------------------------
# All row offsets are multiples of 8 and every block spans the full 128 lanes
# (zero padded), so every in-kernel slice is (8,128)-tile aligned.
HPAD = 128                                # hidden width padded to one lane group
ROW_W_REP = 0                             # rows [  0,  64): w_rep   (D_IN, HPAD)
ROW_B_REP = D_IN                          # row    64      : b_rep   (1,    HPAD)
ROW_W_HEADS = D_IN + 8                    # rows [ 72, 200): w_heads (HPAD, 128)
ROW_B_HEADS = ROW_W_HEADS + HPAD          # row   200      : b_heads (1,    128)
SLAB_ROWS = ROW_B_HEADS + 8               # 208
SLAB_LANES = 128

MAX_BATCH_TILE = 256                      # MXU row dim on v6e/v7x (>= v5e's 128)


def _round_up(x, m):
    return (x + m - 1) // m * m


def _initial_kernel(img_ref, slab_ref, out_ref):
    """representation (Linear+ReLU) -> fused [value | policy] head matmul."""
    img = img_ref[...]                                        # (TB, D_IN)

    # representation_network: one MXU matmul + VPU bias/ReLU.
    w_rep = slab_ref[ROW_W_REP:ROW_W_REP + D_IN, :]           # (D_IN, 128)
    b_rep = slab_ref[ROW_B_REP:ROW_B_REP + 1, :]              # (1, 128)
    h = jnp.dot(img, w_rep, preferred_element_type=jnp.float32)
    h = jnp.maximum(h + b_rep, 0.0)                           # (TB, 128); lanes >= HIDDEN stay 0

    # Fused heads: one matmul produces [value | policy | zero-pad] lane-dense.
    w_heads = slab_ref[ROW_W_HEADS:ROW_W_HEADS + HPAD, :]     # (128, 128)
    b_heads = slab_ref[ROW_B_HEADS:ROW_B_HEADS + 1, :]        # (1, 128)
    out_ref[...] = (jnp.dot(h, w_heads, preferred_element_type=jnp.float32)
                    + b_heads)                                # (TB, 128); lanes >= HEADS_W are 0


@jax.jit
def initial_model(image, slab):
    """image: (B, C, H, W) float32 (NCHW, like PyTorch); slab: packed params.

    Returns (value, policy_logits) with shapes (B, 1) and (B, N_ACTIONS).
    """
    b = image.shape[0]
    img = image.reshape(b, D_IN).astype(jnp.float32)

    # Batch tiling: at least one full sublane group; at most one MXU row fill.
    tb = min(_round_up(b, 8), MAX_BATCH_TILE)
    pb = _round_up(b, tb)
    if pb != b:
        img = jnp.pad(img, ((0, pb - b), (0, 0)))

    fused = pl.pallas_call(
        _initial_kernel,
        out_shape=jax.ShapeDtypeStruct((pb, SLAB_LANES), jnp.float32),
        grid=(pb // tb,),
        in_specs=[
            pl.BlockSpec((tb, D_IN), lambda i: (i, 0)),
            pl.BlockSpec((SLAB_ROWS, SLAB_LANES), lambda i: (0, 0)),  # resident params
        ],
        out_specs=pl.BlockSpec((tb, SLAB_LANES), lambda i: (i, 0)),
        compiler_params=pltpu.CompilerParams(
            dimension_semantics=("parallel",)),   # shards batch tiles across v7x's 2 TCs
    )(img, slab)

    # Tiny slices only to honor the module's (value, policy_logits) tuple contract;
    # downstream code that can consume the fused array should use it directly.
    value = fused[:b, 0:1]
    policy_logits = fused[:b, 1:HEADS_W]
    return value, policy_logits


def init_params(key):
    ks = jax.random.split(key, 6)
    scale = 0.1
    return {
        "w_rep": scale * jax.random.normal(ks[0], (D_IN, HIDDEN), jnp.float32),
        "b_rep": scale * jax.random.normal(ks[1], (1, HIDDEN), jnp.float32),
        "w_val": scale * jax.random.normal(ks[2], (HIDDEN, 1), jnp.float32),
        "b_val": scale * jax.random.normal(ks[3], (1, 1), jnp.float32),
        "w_pol": scale * jax.random.normal(ks[4], (HIDDEN, N_ACTIONS), jnp.float32),
        "b_pol": scale * jax.random.normal(ks[5], (1, N_ACTIONS), jnp.float32),
    }


def pack_params(params):
    """Pack all weights/biases into one (208, 128) f32 slab — done ONCE at init."""
    slab = jnp.zeros((SLAB_ROWS, SLAB_LANES), jnp.float32)
    slab = slab.at[ROW_W_REP:ROW_W_REP + D_IN, 0:HIDDEN].set(params["w_rep"])
    slab = slab.at[ROW_B_REP, 0:HIDDEN].set(params["b_rep"].reshape(HIDDEN))
    slab = slab.at[ROW_W_HEADS:ROW_W_HEADS + HIDDEN, 0:1].set(params["w_val"])
    slab = slab.at[ROW_W_HEADS:ROW_W_HEADS + HIDDEN, 1:HEADS_W].set(params["w_pol"])
    slab = slab.at[ROW_B_HEADS, 0:1].set(params["b_val"].reshape(1))
    slab = slab.at[ROW_B_HEADS, 1:HEADS_W].set(params["b_pol"].reshape(N_ACTIONS))
    return slab


def reference(image, params):
    """Pure-JAX reference of the same forward for a sanity check."""
    b = image.shape[0]
    x = image.reshape(b, D_IN).astype(jnp.float32)
    h = jnp.maximum(x @ params["w_rep"] + params["b_rep"], 0.0)
    value = h @ params["w_val"] + params["b_val"]
    policy = h @ params["w_pol"] + params["b_pol"]
    return value, policy


if __name__ == "__main__":
    key = jax.random.PRNGKey(0)
    k_img, k_img2, k_par = jax.random.split(key, 3)
    params = init_params(k_par)
    slab = pack_params(params)          # built once at init, reused every call
    slab = jax.block_until_ready(slab)

    # Small demo batch (matches the module-sized example).
    image = jax.random.normal(k_img, (2, C, H_IMG, W_IMG), jnp.float32)   # NCHW
    value, policy = initial_model(image, slab)
    jax.block_until_ready((value, policy))
    v_ref, p_ref = reference(image, params)
    assert value.shape == (2, 1) and policy.shape == (2, N_ACTIONS)
    assert jnp.allclose(value, v_ref, atol=1e-5, rtol=1e-5)
    assert jnp.allclose(policy, p_ref, atol=1e-5, rtol=1e-5)

    # Batched path (exercises row padding; same kernel, amortizes launch cost).
    image_b = jax.random.normal(k_img2, (50, C, H_IMG, W_IMG), jnp.float32)
    value_b, policy_b = initial_model(image_b, slab)
    jax.block_until_ready((value_b, policy_b))
    v_ref_b, p_ref_b = reference(image_b, params)
    assert jnp.allclose(value_b, v_ref_b, atol=1e-5, rtol=1e-5)
    assert jnp.allclose(policy_b, p_ref_b, atol=1e-5, rtol=1e-5)

    print("KERNEL_OK")
</pallas_src>

<mosaic_0001>
module attributes {stable_mosaic.version = 11 : i64} {
  func.func @_initial_kernel(%arg0: i32, %arg1: memref<8x64xf32, #tpu.memory_space<vmem>>, %arg2: memref<208x128xf32, #tpu.memory_space<vmem>>, %arg3: memref<8x128xf32, #tpu.memory_space<vmem>>) attributes {dimension_semantics = [#tpu.dimension_semantics<parallel>], iteration_bounds = array<i64: 1>, scalar_prefetch = 0 : i64, scratch_operands = 0 : i64, tpu.core_type = #tpu.core_type<tc>, window_params = [{transform_indices = @transform_0, window_bounds = array<i64: 8, 64>}, {pipeline_mode = #tpu.pipeline_mode<synchronous>, transform_indices = @transform_1, window_bounds = array<i64: 208, 128>}, {transform_indices = @transform_2, window_bounds = array<i64: 8, 128>}]} {
    %c0 = arith.constant 0 : index
    %c0_0 = arith.constant 0 : index
    %0 = vector.load %arg1[%c0, %c0_0] : memref<8x64xf32, #tpu.memory_space<vmem>>, vector<8x64xf32>
    %c0_1 = arith.constant 0 : index
    %c0_2 = arith.constant 0 : index
    %1 = vector.load %arg2[%c0_1, %c0_2] : memref<208x128xf32, #tpu.memory_space<vmem>>, vector<64x128xf32>
    %c64 = arith.constant 64 : index
    %c0_3 = arith.constant 0 : index
    %2 = vector.load %arg2[%c64, %c0_3] : memref<208x128xf32, #tpu.memory_space<vmem>>, vector<1x128xf32>
    %cst = arith.constant dense<0.000000e+00> : vector<8x128xf32>
    %3 = tpu.matmul %0, %1, %cst {dimension_numbers = #tpu.dot_dimension_numbers<[1], [0], [0], [1], [0, 0, 1, 1], [], []>} : vector<8x64xf32>, vector<64x128xf32>, vector<8x128xf32> -> vector<8x128xf32>
    %4 = vector.broadcast %2 : vector<1x128xf32> to vector<8x128xf32>
    %5 = arith.addf %3, %4 : vector<8x128xf32>
    %cst_4 = arith.constant 0.000000e+00 : f32
    %6 = vector.broadcast %cst_4 : f32 to vector<8x128xf32>
    %7 = arith.maximumf %5, %6 : vector<8x128xf32>
    %c72 = arith.constant 72 : index
    %c0_5 = arith.constant 0 : index
    %8 = vector.load %arg2[%c72, %c0_5] : memref<208x128xf32, #tpu.memory_space<vmem>>, vector<128x128xf32>
    %c200 = arith.constant 200 : index
    %c0_6 = arith.constant 0 : index
    %9 = vector.load %arg2[%c200, %c0_6] : memref<208x128xf32, #tpu.memory_space<vmem>>, vector<1x128xf32>
    %cst_7 = arith.constant dense<0.000000e+00> : vector<8x128xf32>
    %10 = tpu.matmul %7, %8, %cst_7 {dimension_numbers = #tpu.dot_dimension_numbers<[1], [0], [0], [1], [0, 0, 1, 1], [], []>} : vector<8x128xf32>, vector<128x128xf32>, vector<8x128xf32> -> vector<8x128xf32>
    %11 = vector.broadcast %9 : vector<1x128xf32> to vector<8x128xf32>
    %12 = arith.addf %10, %11 : vector<8x128xf32>
    %c0_8 = arith.constant 0 : index
    %c0_9 = arith.constant 0 : index
    %13 = vector.load %arg3[%c0_8, %c0_9] : memref<8x128xf32, #tpu.memory_space<vmem>>, vector<8x128xf32>
    tpu.vector_store %arg3[%c0_8, %c0_9], %12 {strides = array<i32>} : memref<8x128xf32, #tpu.memory_space<vmem>>, vector<8x128xf32>,
    return
  }
  func.func @transform_0(%arg0: i32) -> (i32, i32) {
    %c0_i32 = arith.constant 0 : i32
    %c0_i32_0 = arith.constant 0 : i32
    return %arg0, %c0_i32 : i32, i32
  }
  func.func @transform_1(%arg0: i32) -> (i32, i32) {
    %c0_i32 = arith.constant 0 : i32
    %c0_i32_0 = arith.constant 0 : i32
    %c0_i32_1 = arith.constant 0 : i32
    return %c0_i32, %c0_i32_0 : i32, i32
  }
  func.func @transform_2(%arg0: i32) -> (i32, i32) {
    %c0_i32 = arith.constant 0 : i32
    %c0_i32_0 = arith.constant 0 : i32
    return %arg0, %c0_i32 : i32, i32
  }
}

</mosaic_0001>

<llo_original>
// kernel: initial_model.1
$region0: #{initial_model.1}
  #allocation0 [shape = 'u32[]', space=smem, size = 0x4, offset = 0x4, fixed_abs, tag = 'smem constant byte address 0x4 - core index']
  #allocation1 [shape = 'u32[72,128]{1,0:T(1,128)}', space=vmem, size = 0x9000, scoped, tag = 'internal scratch']
  %s0 = inlined_call_operand.vmem [shape: f32[8,64], index: 0, kind: input, shape index: {}]
  %s1 = inlined_call_operand.hbm [shape: f32[208,128], index: 1, kind: input, shape index: {}]
  %s2 = inlined_call_operand.vmem [shape: f32[8,128], index: 2, kind: output, shape index: {}]
  %s3 = sld [smem:[#allocation0]]
  $region22: #{initial_model.1} parent=0
    _
  %s5 = ssub.s32 1, %s3
  %s6 = scalar_select 0, %s5, %s3
  $region1: #{initial_model.1} parent=0
    #allocation2 [shape = 'u8[106496]{0}', space=vmem, size = 0x1a000, scoped, tag = 'input window, operand 1, single buffered']
    #allocation3 [shape = 's32[1]{0}', space=sflag, size = 0x4, scoped, tag = 'scoped memory for initial_model.1']
    %7 = vsyncpa [#allocation3], 0
    // Predicated region
    $region2: #{initial_model.1} parent=1 // pred_check
      _
    $region3: #{initial_model.1} parent=1 // pred_check_branch
      %9 = sbr.rel (0) target = $region5
    $region4: #{initial_model.1} parent=1 // pred_region
      _
    $region5: #{initial_model.1} parent=1 // pred_fallthru
      _
    // Predicated region
    $region6: #{initial_model.1} parent=1 // pred_check
      _
    $region7: #{initial_model.1} parent=1 // pred_check_branch
      %11 = sbr.rel (0) target = $region9
    $region8: #{initial_model.1} parent=1 // pred_region
      %13 = vsyncadd [#allocation3], 0
      %s14 = sshll.u32 %s1, 4
      %s15 = int_to_ptr.hbm [resolvable:$true] %s14
      %s16 = sshll.u32 [#allocation2], 4
      %s17 = int_to_ptr.vmem [resolvable:$true] %s16
      %22 = dma.hbm_to_vmem [thread:$0]  %s15, 3328, %s17, [#allocation3], 128, 128, 8
    $region9: #{initial_model.1} parent=1 // pred_fallthru
      _
    // Predicated region
    $region10: #{initial_model.1} parent=1 // pred_check
      _
    $region11: #{initial_model.1} parent=1 // pred_check_branch
      %24 = sbr.rel (0) target = $region13
    $region12: #{initial_model.1} parent=1 // pred_region
      %26 = dma.done [#allocation3], 3328
    $region13: #{initial_model.1} parent=1 // pred_fallthru
      _
    %v27 = vld [vmem:[%s0] sm:$0xff]
    %v28 = vld [vmem:[#allocation2] sm:$0xff]
    %v29 = vld [vmem:[#allocation2 + $0x8] sm:$0xff]
    %v30 = vld [vmem:[#allocation2 + $0x10] sm:$0xff]
    %v31 = vld [vmem:[#allocation2 + $0x18] sm:$0xff]
    %v32 = vld [vmem:[#allocation2 + $0x20] sm:$0xff]
    %v33 = vld [vmem:[#allocation2 + $0x28] sm:$0xff]
    %v34 = vld [vmem:[#allocation2 + $0x30] sm:$0xff]
    %v35 = vld [vmem:[#allocation2 + $0x38] sm:$0xff]
    %v36 = vld [vmem:[#allocation2 + $0x40] sm:$0x1]
    %v37 = vperm.slane %v36, 0
    %vm38 = vcmask 523264
    %v40 = vsel %vm38, %v27, 0
    %42 = vmatpush.msra.mxu0 0.0
    %43 = vmatpush.msra.mxu0 0.0
    %44 = vmatpush.msra.mxu0 0.0
    %45 = vmatpush.msra.mxu0 0.0
    %46 = vmatpush.msra.mxu0 0.0
    %47 = vmatpush.msra.mxu0 0.0
    %48 = vmatpush.msra.mxu0 0.0
    %49 = vmatpush.msra.mxu0 0.0
    %50 = vmatpush.msra.mxu0 %v35
    %51 = vmatpush.msra.mxu0 %v34
    %52 = vmatpush.msra.mxu0 %v33
    %53 = vmatpush.msra.mxu0 %v32
    %54 = vmatpush.msra.mxu0 %v31
    %55 = vmatpush.msra.mxu0 %v30
    %56 = vmatpush.msra.mxu0 %v29
    %57 = vmatpush.msra.mxu0 %v28
    %58 = vmatmul.f32.gmra.mxu0 %v40
    %v59 = vpop.f32.mrf.mxu0
    %v60 = vadd.f32 %v37, %v59
    %61 = vdwg.mxu0
    %v62 = vmax.f32 %v60, 0.0
    %v63 = vld [vmem:[#allocation2 + $0x48] sm:$0xff]
    %v64 = vld [vmem:[#allocation2 + $0x50] sm:$0xff]
    %v65 = vld [vmem:[#allocation2 + $0x58] sm:$0xff]
    %v66 = vld [vmem:[#allocation2 + $0x60] sm:$0xff]
    %v67 = vld [vmem:[#allocation2 + $0x68] sm:$0xff]
    %v68 = vld [vmem:[#allocation2 + $0x70] sm:$0xff]
    %v69 = vld [vmem:[#allocation2 + $0x78] sm:$0xff]
    %v70 = vld [vmem:[#allocation2 + $0x80] sm:$0xff]
    %v71 = vld [vmem:[#allocation2 + $0x88] sm:$0xff]
    %v72 = vld [vmem:[#allocation2 + $0x90] sm:$0xff]
    %v73 = vld [vmem:[#allocation2 + $0x98] sm:$0xff]
    %v74 = vld [vmem:[#allocation2 + $0xa0] sm:$0xff]
    %v75 = vld [vmem:[#allocation2 + $0xa8] sm:$0xff]
    %v76 = vld [vmem:[#allocation2 + $0xb0] sm:$0xff]
    %v77 = vld [vmem:[#allocation2 + $0xb8] sm:$0xff]
    %v78 = vld [vmem:[#allocation2 + $0xc0] sm:$0xff]
    %v79 = vld [vmem:[#allocation2 + $0xc8] sm:$0x1]
    %v80 = vperm.slane %v79, 0
    %81 = vmatpush.msra.mxu0 %v78
    %82 = vmatpush.msra.mxu0 %v77
    %83 = vmatpush.msra.mxu0 %v76
    %84 = vmatpush.msra.mxu0 %v75
    %85 = vmatpush.msra.mxu0 %v74
    %86 = vmatpush.msra.mxu0 %v73
    %87 = vmatpush.msra.mxu0 %v72
    %88 = vmatpush.msra.mxu0 %v71
    %89 = vmatpush.msra.mxu0 %v70
    %90 = vmatpush.msra.mxu0 %v69
    %91 = vmatpush.msra.mxu0 %v68
    %92 = vmatpush.msra.mxu0 %v67
    %93 = vmatpush.msra.mxu0 %v66
    %94 = vmatpush.msra.mxu0 %v65
    %95 = vmatpush.msra.mxu0 %v64
    %96 = vmatpush.msra.mxu0 %v63
    %97 = vmatmul.f32.gmra.mxu0 %v62
    %v98 = vpop.f32.mrf.mxu0
    %v99 = vadd.f32 %v80, %v98
    %100 = vdwg.mxu0
    %101 = vst [vmem:[%s2] sm:$0xff] %v99
    // Predicated region
    $region14: #{initial_model.1} parent=1 // pred_check
      _
    $region15: #{initial_model.1} parent=1 // pred_check_branch
      %103 = sbr.rel (0) target = $region17
    $region16: #{initial_model.1} parent=1 // pred_region
      _
    $region17: #{initial_model.1} parent=1 // pred_fallthru
      _
    // Predicated region
    $region18: #{initial_model.1} parent=1 // pred_check
      _
    $region19: #{initial_model.1} parent=1 // pred_check_branch
      %105 = sbr.rel (0) target = $region21
    $region20: #{initial_model.1} parent=1 // pred_region
      _
    $region21: #{initial_model.1} parent=1 // pred_fallthru
      _
    %106 = vsyncpa [#allocation3], 1

</llo_original>
